<compile_context>
chip_gen: v7x
topology: tpu7x:2x2x1
jax: 0.10.0
libtpu: 0.0.40
codegen_flags: <defaults>
</compile_context>

<pallas_src>
import jax
import jax.numpy as jnp
import numpy as np
from jax import lax
from jax.experimental import pallas as pl
from jax.experimental.pallas import tpu as pltpu


def _stats_kernel(a_ref, w_ref, b_ref, stats_ref):
    # a_ref:     (1, 4*Cin, T)   bf16  -- polyphase im2col slab tile
    # w_ref:     (4*Cout, 4*Cin) bf16  -- fused polyphase weights
    # b_ref:     (4*Cout, 1)     f32   -- conv bias tiled over the 4 phases
    # stats_ref: (1, 1, 4*Cout, 2) f32 -- per-(batch,tile) partial [sum, sumsq]
    r = jnp.dot(w_ref[...], a_ref[0], preferred_element_type=jnp.float32)
    r = r + b_ref[...]
    s = jnp.sum(r, axis=1, keepdims=True)         # (4*Cout, 1)
    sq = jnp.sum(r * r, axis=1, keepdims=True)    # (4*Cout, 1)
    stats_ref[0, 0] = jnp.concatenate([s, sq], axis=1)


def _apply_kernel(a_ref, w_ref, alpha_ref, delta_ref, o_ref):
    # Recompute the conv tile and apply the fused per-channel BN affine:
    #   out = conv_raw * alpha + delta, with alpha/delta folding conv bias,
    #   batch mean/var, gamma and beta.  Store is lane-dense (last dim = T).
    r = jnp.dot(w_ref[...], a_ref[0], preferred_element_type=jnp.float32)
    o_ref[0] = (r * alpha_ref[...] + delta_ref[...]).astype(o_ref.dtype)


def _choose_tile(hw):
    # Largest 128-multiple divisor of H*W up to 2048 (keeps double-buffered
    # tiles comfortably inside the 32 MiB scoped VMEM budget, v7x included).
    for t in (2048, 1024, 512, 256, 128):
        if hw % t == 0:
            return t
    return hw  # tiny / odd spatial sizes: single tile


def upsampler_block(x_nchw, w_t, bias, gamma, beta, *, eps=1e-5):
    """x_nchw: (N, Cin, H, W); w_t: (Cin, Cout, 3, 3) ConvTranspose2d weight."""
    N, Cin, H, W = x_nchw.shape
    Cout = w_t.shape[1]
    HW = H * W
    T = _choose_tile(HW)
    nt = HW // T

    # ---- glue: polyphase im2col slab, channel-major, pixels on lanes ----
    # A[n, j*Cin+ci, m*W+k] = x[n, ci, m+dj, k+dk] (zero-padded bottom/right),
    # j = dj*2 + dk, dj/dk in {0,1}.
    xb = x_nchw.astype(jnp.bfloat16)
    xp = jnp.pad(xb, ((0, 0), (0, 0), (0, 1), (0, 1)))
    shifts = [xp[:, :, dm:dm + H, dk:dk + W]
              for dm in range(2) for dk in range(2)]
    A = jnp.concatenate(shifts, axis=1).reshape(N, 4 * Cin, HW)

    # ---- fused polyphase weight (4*Cout, 4*Cin) ----
    # Row block (ph*2+pw) holds the weights producing output parity (ph, pw);
    # column block j holds the tap multiplying input shift (dj, dk).
    tap = {0: (1, None), 1: (2, 0)}  # parity -> (tap for shift 0, tap for shift 1)
    wt32 = w_t.astype(jnp.float32)
    zero_blk = jnp.zeros((Cout, Cin), jnp.float32)
    row_blocks = []
    for ph in range(2):
        for pw in range(2):
            cols = []
            for dj in range(2):
                for dk in range(2):
                    kh = tap[ph][dj]
                    kw = tap[pw][dk]
                    if kh is None or kw is None:
                        cols.append(zero_blk)
                    else:
                        cols.append(wt32[:, :, kh, kw].T)  # (Cout, Cin)
            row_blocks.append(jnp.concatenate(cols, axis=1))
    Wmat = jnp.concatenate(row_blocks, axis=0).astype(jnp.bfloat16)

    bias_f = bias.astype(jnp.float32)
    bias4 = jnp.tile(bias_f, 4).reshape(4 * Cout, 1)

    cp = pltpu.CompilerParams(
        dimension_semantics=("parallel", "parallel"),
        vmem_limit_bytes=32 * 1024 * 1024,  # safe for v5e/v6e and v7x's 64 MiB
    )

    # ---- pass 1: per-(batch, tile) partial sum / sum-of-squares ----
    stats = pl.pallas_call(
        _stats_kernel,
        out_shape=jax.ShapeDtypeStruct((N, nt, 4 * Cout, 2), jnp.float32),
        grid=(N, nt),
        in_specs=[
            pl.BlockSpec((1, 4 * Cin, T), lambda n, t: (n, 0, t)),
            pl.BlockSpec((4 * Cout, 4 * Cin), lambda n, t: (0, 0)),
            pl.BlockSpec((4 * Cout, 1), lambda n, t: (0, 0)),
        ],
        out_specs=pl.BlockSpec((1, 1, 4 * Cout, 2), lambda n, t: (n, t, 0, 0)),
        compiler_params=cp,
    )(A, Wmat, bias4)

    # ---- tiny O(Cout) reduction + fused BN affine (plain JAX) ----
    count = jnp.float32(N * 4 * HW)              # = N * (2H) * (2W)
    totals = jnp.sum(stats, axis=(0, 1))         # (4*Cout, 2)
    sums = totals[:, 0].reshape(4, Cout).sum(axis=0)
    sumsq = totals[:, 1].reshape(4, Cout).sum(axis=0)
    mean = sums / count
    var = jnp.maximum(sumsq / count - mean * mean, 0.0)   # biased (BN training)
    scale = gamma.astype(jnp.float32) * lax.rsqrt(var + eps)
    shift = beta.astype(jnp.float32) - mean * scale
    alpha4 = jnp.tile(scale, 4).reshape(4 * Cout, 1)
    delta4 = jnp.tile(bias_f * scale + shift, 4).reshape(4 * Cout, 1)

    # ---- pass 2: recompute conv tile, apply affine, lane-dense store ----
    out_r = pl.pallas_call(
        _apply_kernel,
        out_shape=jax.ShapeDtypeStruct((N, 4 * Cout, HW), jnp.float32),
        grid=(N, nt),
        in_specs=[
            pl.BlockSpec((1, 4 * Cin, T), lambda n, t: (n, 0, t)),
            pl.BlockSpec((4 * Cout, 4 * Cin), lambda n, t: (0, 0)),
            pl.BlockSpec((4 * Cout, 1), lambda n, t: (0, 0)),
            pl.BlockSpec((4 * Cout, 1), lambda n, t: (0, 0)),
        ],
        out_specs=pl.BlockSpec((1, 4 * Cout, T), lambda n, t: (n, 0, t)),
        compiler_params=cp,
    )(A, Wmat, alpha4, delta4)

    # ---- phase de-interleave back to PyTorch NCHW (single XLA transpose) ----
    out = out_r.reshape(N, 2, 2, Cout, H, W)          # (n, ph, pw, co, m, k)
    out = jnp.transpose(out, (0, 3, 4, 1, 5, 2))       # (n, co, m, ph, k, pw)
    return out.reshape(N, Cout, 2 * H, 2 * W)


def _reference_numpy(x, wt, b, gamma, beta, eps=1e-5):
    """Direct scatter-form ConvTranspose2d + training-mode BatchNorm2d (NCHW)."""
    N, Cin, H, W = x.shape
    Cout = wt.shape[1]
    Ho, Wo = 2 * H, 2 * W
    y = np.zeros((N, Cout, Ho, Wo), np.float64)
    for ih in range(H):
        for iw in range(W):
            for kh in range(3):
                for kw in range(3):
                    oh = ih * 2 - 1 + kh
                    ow = iw * 2 - 1 + kw
                    if 0 <= oh < Ho and 0 <= ow < Wo:
                        y[:, :, oh, ow] += np.einsum(
                            'nc,cd->nd', x[:, :, ih, iw], wt[:, :, kh, kw])
    y += b[None, :, None, None]
    mean = y.mean(axis=(0, 2, 3), keepdims=True)
    var = y.var(axis=(0, 2, 3), keepdims=True)   # biased, as in BN training
    return ((y - mean) / np.sqrt(var + eps) * gamma[None, :, None, None]
            + beta[None, :, None, None])


if __name__ == "__main__":
    in_channels, out_channels = 4, 8
    N, H, W = 2, 16, 16

    key = jax.random.PRNGKey(0)
    kx, kw, kb, kg, kbt = jax.random.split(key, 5)

    x = jax.random.normal(kx, (N, in_channels, H, W), jnp.float32)

    # Parameter shapes per nn.ConvTranspose2d / nn.BatchNorm2d.
    fan = 1.0 / np.sqrt(in_channels * 3 * 3)
    w_t = jax.random.uniform(kw, (in_channels, out_channels, 3, 3),
                             jnp.float32, -fan, fan)
    bias = jax.random.uniform(kb, (out_channels,), jnp.float32, -fan, fan)
    gamma = 1.0 + 0.1 * jax.random.uniform(kg, (out_channels,), jnp.float32, -1.0, 1.0)
    beta = 0.1 * jax.random.uniform(kbt, (out_channels,), jnp.float32, -1.0, 1.0)

    out = jax.jit(upsampler_block)(x, w_t, bias, gamma, beta)
    out = jax.block_until_ready(out)

    ref = _reference_numpy(np.asarray(x, np.float64), np.asarray(w_t, np.float64),
                           np.asarray(bias, np.float64), np.asarray(gamma, np.float64),
                           np.asarray(beta, np.float64))
    np.testing.assert_allclose(np.asarray(out), ref, rtol=2e-2, atol=2e-2)
    assert out.shape == (N, out_channels, 2 * H, 2 * W)

    print("KERNEL_OK")
</pallas_src>

<mosaic_0001>
module attributes {stable_mosaic.version = 11 : i64} {
  func.func @_stats_kernel(%arg0: i32, %arg1: i32, %arg2: memref<1x16x256xbf16, #tpu.memory_space<vmem>>, %arg3: memref<32x16xbf16, #tpu.memory_space<vmem>>, %arg4: memref<32x1xf32, #tpu.memory_space<vmem>>, %arg5: memref<1x1x32x2xf32, #tpu.memory_space<vmem>>) attributes {dimension_semantics = [#tpu.dimension_semantics<parallel>, #tpu.dimension_semantics<parallel>], iteration_bounds = array<i64: 2, 1>, scalar_prefetch = 0 : i64, scratch_operands = 0 : i64, tpu.core_type = #tpu.core_type<tc>, window_params = [{transform_indices = @transform_0, window_bounds = array<i64: 1, 16, 256>}, {pipeline_mode = #tpu.pipeline_mode<synchronous>, transform_indices = @transform_1, window_bounds = array<i64: 32, 16>}, {pipeline_mode = #tpu.pipeline_mode<synchronous>, transform_indices = @transform_2, window_bounds = array<i64: 32, 1>}, {transform_indices = @transform_3, window_bounds = array<i64: 1, 1, 32, 2>}]} {
    %c0 = arith.constant 0 : index
    %c0_0 = arith.constant 0 : index
    %0 = vector.load %arg3[%c0, %c0_0] : memref<32x16xbf16, #tpu.memory_space<vmem>>, vector<32x16xbf16>
    %c0_1 = arith.constant 0 : index
    %c0_2 = arith.constant 0 : index
    %c0_3 = arith.constant 0 : index
    %1 = vector.load %arg2[%c0_1, %c0_2, %c0_3] : memref<1x16x256xbf16, #tpu.memory_space<vmem>>, vector<1x16x256xbf16>
    %2 = vector.shape_cast %1 : vector<1x16x256xbf16> to vector<16x256xbf16>
    %cst = arith.constant dense<0.000000e+00> : vector<32x256xf32>
    %3 = tpu.matmul %0, %2, %cst {dimension_numbers = #tpu.dot_dimension_numbers<[1], [0], [0], [1], [0, 0, 1, 1], [], []>} : vector<32x16xbf16>, vector<16x256xbf16>, vector<32x256xf32> -> vector<32x256xf32>
    %c0_4 = arith.constant 0 : index
    %c0_5 = arith.constant 0 : index
    %4 = vector.load %arg4[%c0_4, %c0_5] : memref<32x1xf32, #tpu.memory_space<vmem>>, vector<32x1xf32>
    %5 = vector.broadcast %4 : vector<32x1xf32> to vector<32x256xf32>
    %6 = arith.addf %3, %5 : vector<32x256xf32>
    %cst_6 = arith.constant dense<0.000000e+00> : vector<32xf32>
    %7 = vector.multi_reduction <add>, %6, %cst_6 [1] : vector<32x256xf32> to vector<32xf32>
    %8 = vector.shape_cast %7 : vector<32xf32> to vector<32x1xf32>
    %9 = arith.mulf %6, %6 : vector<32x256xf32>
    %cst_7 = arith.constant dense<0.000000e+00> : vector<32xf32>
    %10 = vector.multi_reduction <add>, %9, %cst_7 [1] : vector<32x256xf32> to vector<32xf32>
    %11 = vector.shape_cast %10 : vector<32xf32> to vector<32x1xf32>
    %12 = tpu.concatenate %8, %11 in 1 : vector<32x1xf32>, vector<32x1xf32> -> vector<32x2xf32>
    %c0_8 = arith.constant 0 : index
    %c0_9 = arith.constant 0 : index
    %c0_10 = arith.constant 0 : index
    %c0_11 = arith.constant 0 : index
    %13 = vector.load %arg5[%c0_8, %c0_9, %c0_10, %c0_11] : memref<1x1x32x2xf32, #tpu.memory_space<vmem>>, vector<1x1x32x2xf32>
    %14 = vector.shape_cast %13 : vector<1x1x32x2xf32> to vector<32x2xf32>
    %15 = vector.shape_cast %12 : vector<32x2xf32> to vector<1x1x32x2xf32>
    tpu.vector_store %arg5[%c0_8, %c0_9, %c0_10, %c0_11], %15 {strides = array<i32>} : memref<1x1x32x2xf32, #tpu.memory_space<vmem>>, vector<1x1x32x2xf32>,
    return
  }
  func.func @transform_0(%arg0: i32, %arg1: i32) -> (i32, i32, i32) {
    %c0_i32 = arith.constant 0 : i32
    %c0_i32_0 = arith.constant 0 : i32
    return %arg0, %c0_i32, %arg1 : i32, i32, i32
  }
  func.func @transform_1(%arg0: i32, %arg1: i32) -> (i32, i32) {
    %c0_i32 = arith.constant 0 : i32
    %c0_i32_0 = arith.constant 0 : i32
    %c0_i32_1 = arith.constant 0 : i32
    return %c0_i32, %c0_i32_0 : i32, i32
  }
  func.func @transform_2(%arg0: i32, %arg1: i32) -> (i32, i32) {
    %c0_i32 = arith.constant 0 : i32
    %c0_i32_0 = arith.constant 0 : i32
    %c0_i32_1 = arith.constant 0 : i32
    return %c0_i32, %c0_i32_0 : i32, i32
  }
  func.func @transform_3(%arg0: i32, %arg1: i32) -> (i32, i32, i32, i32) {
    %c0_i32 = arith.constant 0 : i32
    %c0_i32_0 = arith.constant 0 : i32
    %c0_i32_1 = arith.constant 0 : i32
    return %arg0, %arg1, %c0_i32, %c0_i32_0 : i32, i32, i32, i32
  }
}

module attributes {stable_mosaic.version = 11 : i64} {
  func.func @_apply_kernel(%arg0: i32, %arg1: i32, %arg2: memref<1x16x256xbf16, #tpu.memory_space<vmem>>, %arg3: memref<32x16xbf16, #tpu.memory_space<vmem>>, %arg4: memref<32x1xf32, #tpu.memory_space<vmem>>, %arg5: memref<32x1xf32, #tpu.memory_space<vmem>>, %arg6: memref<1x32x256xf32, #tpu.memory_space<vmem>>) attributes {dimension_semantics = [#tpu.dimension_semantics<parallel>, #tpu.dimension_semantics<parallel>], iteration_bounds = array<i64: 2, 1>, scalar_prefetch = 0 : i64, scratch_operands = 0 : i64, tpu.core_type = #tpu.core_type<tc>, window_params = [{transform_indices = @transform_0, window_bounds = array<i64: 1, 16, 256>}, {pipeline_mode = #tpu.pipeline_mode<synchronous>, transform_indices = @transform_1, window_bounds = array<i64: 32, 16>}, {pipeline_mode = #tpu.pipeline_mode<synchronous>, transform_indices = @transform_2, window_bounds = array<i64: 32, 1>}, {pipeline_mode = #tpu.pipeline_mode<synchronous>, transform_indices = @transform_3, window_bounds = array<i64: 32, 1>}, {transform_indices = @transform_4, window_bounds = array<i64: 1, 32, 256>}]} {
    %c0 = arith.constant 0 : index
    %c0_0 = arith.constant 0 : index
    %0 = vector.load %arg3[%c0, %c0_0] : memref<32x16xbf16, #tpu.memory_space<vmem>>, vector<32x16xbf16>
    %c0_1 = arith.constant 0 : index
    %c0_2 = arith.constant 0 : index
    %c0_3 = arith.constant 0 : index
    %1 = vector.load %arg2[%c0_1, %c0_2, %c0_3] : memref<1x16x256xbf16, #tpu.memory_space<vmem>>, vector<1x16x256xbf16>
    %2 = vector.shape_cast %1 : vector<1x16x256xbf16> to vector<16x256xbf16>
    %cst = arith.constant dense<0.000000e+00> : vector<32x256xf32>
    %3 = tpu.matmul %0, %2, %cst {dimension_numbers = #tpu.dot_dimension_numbers<[1], [0], [0], [1], [0, 0, 1, 1], [], []>} : vector<32x16xbf16>, vector<16x256xbf16>, vector<32x256xf32> -> vector<32x256xf32>
    %c0_4 = arith.constant 0 : index
    %c0_5 = arith.constant 0 : index
    %4 = vector.load %arg4[%c0_4, %c0_5] : memref<32x1xf32, #tpu.memory_space<vmem>>, vector<32x1xf32>
    %5 = vector.broadcast %4 : vector<32x1xf32> to vector<32x256xf32>
    %6 = arith.mulf %3, %5 : vector<32x256xf32>
    %c0_6 = arith.constant 0 : index
    %c0_7 = arith.constant 0 : index
    %7 = vector.load %arg5[%c0_6, %c0_7] : memref<32x1xf32, #tpu.memory_space<vmem>>, vector<32x1xf32>
    %8 = vector.broadcast %7 : vector<32x1xf32> to vector<32x256xf32>
    %9 = arith.addf %6, %8 : vector<32x256xf32>
    %c0_8 = arith.constant 0 : index
    %c0_9 = arith.constant 0 : index
    %c0_10 = arith.constant 0 : index
    %10 = vector.load %arg6[%c0_8, %c0_9, %c0_10] : memref<1x32x256xf32, #tpu.memory_space<vmem>>, vector<1x32x256xf32>
    %11 = vector.shape_cast %10 : vector<1x32x256xf32> to vector<32x256xf32>
    %12 = vector.shape_cast %9 : vector<32x256xf32> to vector<1x32x256xf32>
    tpu.vector_store %arg6[%c0_8, %c0_9, %c0_10], %12 {strides = array<i32>} : memref<1x32x256xf32, #tpu.memory_space<vmem>>, vector<1x32x256xf32>,
    return
  }
  func.func @transform_0(%arg0: i32, %arg1: i32) -> (i32, i32, i32) {
    %c0_i32 = arith.constant 0 : i32
    %c0_i32_0 = arith.constant 0 : i32
    return %arg0, %c0_i32, %arg1 : i32, i32, i32
  }
  func.func @transform_1(%arg0: i32, %arg1: i32) -> (i32, i32) {
    %c0_i32 = arith.constant 0 : i32
    %c0_i32_0 = arith.constant 0 : i32
    %c0_i32_1 = arith.constant 0 : i32
    return %c0_i32, %c0_i32_0 : i32, i32
  }
  func.func @transform_2(%arg0: i32, %arg1: i32) -> (i32, i32) {
    %c0_i32 = arith.constant 0 : i32
    %c0_i32_0 = arith.constant 0 : i32
    %c0_i32_1 = arith.constant 0 : i32
    return %c0_i32, %c0_i32_0 : i32, i32
  }
  func.func @transform_3(%arg0: i32, %arg1: i32) -> (i32, i32) {
    %c0_i32 = arith.constant 0 : i32
    %c0_i32_0 = arith.constant 0 : i32
    %c0_i32_1 = arith.constant 0 : i32
    return %c0_i32, %c0_i32_0 : i32, i32
  }
  func.func @transform_4(%arg0: i32, %arg1: i32) -> (i32, i32, i32) {
    %c0_i32 = arith.constant 0 : i32
    %c0_i32_0 = arith.constant 0 : i32
    return %arg0, %c0_i32, %arg1 : i32, i32, i32
  }
}

</mosaic_0001>

<llo_original>
// kernel: tile.18
$region0: #{tile.18}
  #allocation0 [shape = 's32[1]{0}', space=sflag, size = 0x4, scoped, tag = 'scoped memory for tile.18']
  %s0 = inlined_call_operand.vmem [shape: f32[8], index: 0, kind: input, shape index: {}]
  %s1 = inlined_call_operand.vmem [shape: f32[4,8], index: 1, kind: output, shape index: {}]
  // Predicated region
  $region2: #{tile.18} parent=0 // pred_check
    _
  $region3: #{tile.18} parent=0 // pred_check_branch
    %3 = sbr.rel (0) target = $region5
  $region4: #{tile.18} parent=0 // pred_region
    _
  $region5: #{tile.18} parent=0 // pred_fallthru
    _
  %v4 = vld [vmem:[%s0] ss:$0 sm:$0xff]
  %5 = vst [vmem:[%s1] sm:$0xf] %v4

// kernel: tile.0
$region0: #{tile.0}
  %s0 = inlined_call_operand.vmem [shape: f32[4,8], index: 0, kind: input, shape index: {}]
  %s1 = inlined_call_operand.vmem [shape: f32[32,1], index: 1, kind: output, shape index: {}]
  $region1: #{tile.0} parent=0
    #allocation0 [shape = 'u8[4096]{0}', space=vmem, size = 0x1000, scoped, tag = 'scoped mem for input reshape']
    %s3 = sshllo.u32 0, 4
    %v4 = vld [vmem:[%s0] sm:%s3]
    %5 = vst [vmem:[#allocation0] sm:%s3] %v4
    %v6 = vld [vmem:[#allocation0] sm:$0xf]
    %vm7 = vcmask 7168
    %8 = vst.msk [vmem:[%s1] ss:$8 sm:$0xf] %vm7, %v6
    %v9 = vld [vmem:[#allocation0] sm:$0xf]
    %10 = vrot.lane.b32.xlu0 %v9, 127
    %v11 = vpop.permute.xlu0 %10
    %vm12 = vcmask 7168
    %s13 = scalar_lea.vmem %s1, 1
    %14 = vst.msk [vmem:[%s13] ss:$8 sm:$0xf] %vm12, %v11
    %v15 = vld [vmem:[#allocation0] sm:$0xf]
    %16 = vrot.lane.b32.xlu0 %v15, 126
    %v17 = vpop.permute.xlu0 %16
    %vm18 = vcmask 7168
    %s19 = scalar_lea.vmem %s1, 2
    %20 = vst.msk [vmem:[%s19] ss:$8 sm:$0xf] %vm18, %v17
    %v21 = vld [vmem:[#allocation0] sm:$0xf]
    %22 = vrot.lane.b32.xlu0 %v21, 125
    %v23 = vpop.permute.xlu0 %22
    %vm24 = vcmask 7168
    %s25 = scalar_lea.vmem %s1, 3
    %26 = vst.msk [vmem:[%s25] ss:$8 sm:$0xf] %vm24, %v23
    %v27 = vld [vmem:[#allocation0] sm:$0xf]
    %28 = vrot.lane.b32.xlu0 %v27, 124
    %v29 = vpop.permute.xlu0 %28
    %vm30 = vcmask 7168
    %s31 = scalar_lea.vmem %s1, 4
    %32 = vst.msk [vmem:[%s31] ss:$8 sm:$0xf] %vm30, %v29
    %v33 = vld [vmem:[#allocation0] sm:$0xf]
    %34 = vrot.lane.b32.xlu0 %v33, 123
    %v35 = vpop.permute.xlu0 %34
    %vm36 = vcmask 7168
    %s37 = scalar_lea.vmem %s1, 5
    %38 = vst.msk [vmem:[%s37] ss:$8 sm:$0xf] %vm36, %v35
    %v39 = vld [vmem:[#allocation0] sm:$0xf]
    %40 = vrot.lane.b32.xlu0 %v39, 122
    %v41 = vpop.permute.xlu0 %40
    %vm42 = vcmask 7168
    %s43 = scalar_lea.vmem %s1, 6
    %44 = vst.msk [vmem:[%s43] ss:$8 sm:$0xf] %vm42, %v41
    %v45 = vld [vmem:[#allocation0] sm:$0xf]
    %46 = vrot.lane.b32.xlu0 %v45, 121
    %v47 = vpop.permute.xlu0 %46
    %vm48 = vcmask 7168
    %s49 = scalar_lea.vmem %s1, 7
    %50 = vst.msk [vmem:[%s49] ss:$8 sm:$0xf] %vm48, %v47

// kernel: squeeze.20
$region0: #{squeeze.20}
  %s0 = inlined_call_operand.vmem [shape: f32[32], index: 0, kind: input, shape index: {}]
  %s1 = inlined_call_operand.vmem [shape: f32[4,8], index: 1, kind: output, shape index: {}]
  $region1: #{squeeze.20} parent=0
    #allocation0 [shape = 'u8[4096]{0}', space=vmem, size = 0x1000, scoped, tag = 'scoped mem for output reshape']
    #allocation1 [shape = 'u8[4096]{0}', space=vmem, size = 0x1000, scoped, tag = 'scoped mem for input reshape']
    %s3 = sshllo.u32 0, 1
    %v4 = vld [vmem:[%s0] sm:%s3]
    %5 = vst [vmem:[#allocation1] sm:%s3] %v4
    %v6 = vld [vmem:[#allocation1] sm:$0x1]
    %vm7 = vcmask 64512
    %8 = vst.msk [vmem:[#allocation0] sm:$0x1] %vm7, %v6
    %v9 = vld [vmem:[#allocation1] sm:$0x1]
    %10 = vrot.lane.b32.xlu0 %v9, 120
    %v11 = vpop.permute.xlu0 %10
    %vm12 = vcmask 64512
    %s13 = scalar_lea.vmem [#allocation0], 1
    %14 = vst.msk [vmem:[%s13] sm:$0x1] %vm12, %v11
    %v15 = vld [vmem:[#allocation1] sm:$0x1]
    %16 = vrot.lane.b32.xlu0 %v15, 112
    %v17 = vpop.permute.xlu0 %16
    %vm18 = vcmask 64512
    %s19 = scalar_lea.vmem [#allocation0], 2
    %20 = vst.msk [vmem:[%s19] sm:$0x1] %vm18, %v17
    %v21 = vld [vmem:[#allocation1] sm:$0x1]
    %22 = vrot.lane.b32.xlu0 %v21, 104
    %v23 = vpop.permute.xlu0 %22
    %vm24 = vcmask 64512
    %s25 = scalar_lea.vmem [#allocation0], 3
    %26 = vst.msk [vmem:[%s25] sm:$0x1] %vm24, %v23
    %s28 = sshllo.u32 0, 4
    %v30 = vld [vmem:[#allocation0] sm:%s28]
    %s31 = sshllo.u32 0, 4
    %32 = vst [vmem:[%s1] sm:%s31] %v30

// kernel: upsampler_block.3
$region0: #{upsampler_block.3}
  #allocation0 [shape = 'u32[]', space=smem, size = 0x4, offset = 0x4, fixed_abs, tag = 'smem constant byte address 0x4 - core index']
  #allocation1 [shape = 'u32[144,128]{1,0:T(1,128)}', space=vmem, size = 0x12000, scoped, tag = 'internal scratch']
  %s0 = inlined_call_operand.vmem [shape: bf16[2,16,256], index: 0, kind: input, shape index: {}]
  %s1 = inlined_call_operand.vmem [shape: bf16[32,16], index: 1, kind: input, shape index: {}]
  %s2 = inlined_call_operand.vmem [shape: f32[32,1], index: 2, kind: input, shape index: {}]
  %s3 = inlined_call_operand.vmem [shape: f32[32,1], index: 3, kind: input, shape index: {}]
  %s4 = inlined_call_operand.vmem [shape: f32[2,32,256], index: 4, kind: output, shape index: {}]
  %s5 = sld [smem:[#allocation0]]
  $region49: #{upsampler_block.3} parent=0
    _
  %s7 = ssub.s32 1, %s5
  %s8 = scalar_select 0, %s7, %s5
  loop: start=0, step=1, limit=4
  $region2: #{upsampler_block.3} parent=0 // loop_pre_header
    _
  $region3: #{upsampler_block.3} parent=0 // loop_header
    %s10 = sphi 0, %s14
    %p11 = scmp.ge.s32.totalorder %s10, 4
    %s17 = sphi 0, %s29
    %s18 = sphi 0, %s25
    %s19 = sphi 0, %s17
    %s20 = sphi 0, %s18
    %s21 = sphi 0, %s19
    %s22 = sphi 0, %s20
    %s34 = sphi 0, %s36
    %s37 = sphi 0, %s34
    %s38 = sphi 0, %s37
    %s54 = sphi 0, %s38
    %s58 = sphi 0, %s58
    %s60 = sphi 0, %s58
    %s61 = sphi 0, %s60
    %s75 = sphi 0, %s61
    %s79 = sphi 0, %s79
    %s81 = sphi 0, %s79
    %s82 = sphi 0, %s81
    %s96 = sphi 0, %s82
    %s100 = sphi 0, %s100
    %s102 = sphi 0, %s100
    %s103 = sphi 0, %s102
    %s117 = sphi 0, %s103
    %s125 = sphi 0, %s127
    %s128 = sphi 0, %s125
    %s129 = sphi 0, %s128
    %s145 = sphi 0, %s129
  $region4: #{upsampler_block.3} parent=0 // loop_header_branch
    %13 = sbr.rel (%p11) target = $region8
  $region5: #{upsampler_block.3} parent=0 // loop_body
    %s15 = ssub.s32 %s10, 1
    %s16 = ssub.s32 %s10, 2
    %s23 = sadd.s32 1, %s18
    %p24 = scmp.ge.s32.totalorder %s23, 1
    %s25 = scalar_select %p24, 0, %s23
    %s26 = sadd.s32 1, %s17
    %s27 = scalar_select %p24, %s26, %s17
    %p28 = scmp.ge.s32.totalorder %s27, 2
    %s29 = scalar_select %p28, 0, %s27
    %s30 = ssub.s32 %s17, %s29
    %s31 = ssub.s32 %s18, %s25
    %s32 = sor.u32 %s30, %s31
    %p33 = scmp.eq.s32.totalorder %s32, 0
    %s35 = sadd.s32 %s34, 1
    %s36 = scalar_select %p33, %s34, %s35
    %p39 = pneg %p33
    %p40 = scmp.eq.s32.totalorder %s10, 1
    %p41 = por %p39, %p40
    %p42 = scmp.ne.s32.totalorder %s34, %s37
    %p43 = scmp.eq.s32.totalorder %s10, 0
    %p44 = por %p42, %p43
    %p45 = scmp.ne.s32.totalorder %s34, %s37
    %p46 = scmp.eq.s32.totalorder %s15, 1
    %p47 = por %p45, %p46
    %p48 = scmp.ne.s32.totalorder %s37, %s38
    %p49 = scmp.eq.s32.totalorder %s15, 0
    %p50 = por %p48, %p49
    %p51 = scmp.ne.s32.totalorder %s37, %s38
    %p52 = scmp.eq.s32.totalorder %s16, 1
    %p53 = por %p51, %p52
    %p55 = scmp.ne.s32.totalorder %s38, %s54
    %p56 = scmp.eq.s32.totalorder %s16, 0
    %p57 = por %p55, %p56
    %s59 = sadd.s32 %s58, 1
    %p62 = scmp.eq.s32.totalorder %s10, 1
    %p63 = scmp.ne.s32.totalorder %s58, %s60
    %p64 = scmp.eq.s32.totalorder %s10, 0
    %p65 = por %p63, %p64
    %p66 = scmp.ne.s32.totalorder %s58, %s60
    %p67 = scmp.eq.s32.totalorder %s15, 1
    %p68 = por %p66, %p67
    %p69 = scmp.ne.s32.totalorder %s60, %s61
    %p70 = scmp.eq.s32.totalorder %s15, 0
    %p71 = por %p69, %p70
    %p72 = scmp.ne.s32.totalorder %s60, %s61
    %p73 = scmp.eq.s32.totalorder %s16, 1
    %p74 = por %p72, %p73
    %p76 = scmp.ne.s32.totalorder %s61, %s75
    %p77 = scmp.eq.s32.totalorder %s16, 0
    %p78 = por %p76, %p77
    %s80 = sadd.s32 %s79, 1
    %p83 = scmp.eq.s32.totalorder %s10, 1
    %p84 = scmp.ne.s32.totalorder %s79, %s81
    %p85 = scmp.eq.s32.totalorder %s10, 0
    %p86 = por %p84, %p85
    %p87 = scmp.ne.s32.totalorder %s79, %s81
    %p88 = scmp.eq.s32.totalorder %s15, 1
    %p89 = por %p87, %p88
    %p90 = scmp.ne.s32.totalorder %s81, %s82
    %p91 = scmp.eq.s32.totalorder %s15, 0
    %p92 = por %p90, %p91
    %p93 = scmp.ne.s32.totalorder %s81, %s82
    %p94 = scmp.eq.s32.totalorder %s16, 1
    %p95 = por %p93, %p94
    %p97 = scmp.ne.s32.totalorder %s82, %s96
    %p98 = scmp.eq.s32.totalorder %s16, 0
    %p99 = por %p97, %p98
    %s101 = sadd.s32 %s100, 1
    %p104 = scmp.eq.s32.totalorder %s10, 1
    %p105 = scmp.ne.s32.totalorder %s100, %s102
    %p106 = scmp.eq.s32.totalorder %s10, 0
    %p107 = por %p105, %p106
    %p108 = scmp.ne.s32.totalorder %s100, %s102
    %p109 = scmp.eq.s32.totalorder %s15, 1
    %p110 = por %p108, %p109
    %p111 = scmp.ne.s32.totalorder %s102, %s103
    %p112 = scmp.eq.s32.totalorder %s15, 0
    %p113 = por %p111, %p112
    %p114 = scmp.ne.s32.totalorder %s102, %s103
    %p115 = scmp.eq.s32.totalorder %s16, 1
    %p116 = por %p114, %p115
    %p118 = scmp.ne.s32.totalorder %s103, %s117
    %p119 = scmp.eq.s32.totalorder %s16, 0
    %p120 = por %p118, %p119
    %s121 = ssub.s32 %s17, %s29
    %s122 = ssub.s32 %s18, %s25
    %s123 = sor.u32 %s121, %s122
    %p124 = scmp.eq.s32.totalorder %s123, 0
    %s126 = sadd.s32 %s125, 1
    %s127 = scalar_select %p124, %s125, %s126
    %p130 = pneg %p124
    %p131 = scmp.eq.s32.totalorder %s10, 1
    %p132 = por %p130, %p131
    %p133 = scmp.ne.s32.totalorder %s125, %s128
    %p134 = scmp.eq.s32.totalorder %s10, 0
    %p135 = por %p133, %p134
    %p136 = scmp.ne.s32.totalorder %s125, %s128
    %p137 = scmp.eq.s32.totalorder %s15, 1
    %p138 = por %p136, %p137
    %p139 = scmp.ne.s32.totalorder %s128, %s129
    %p140 = scmp.eq.s32.totalorder %s15, 0
    %p141 = por %p139, %p140
    %p142 = scmp.ne.s32.totalorder %s128, %s129
    %p143 = scmp.eq.s32.totalorder %s16, 1
    %p144 = por %p142, %p143
    %p146 = scmp.ne.s32.totalorder %s129, %s145
    %p147 = scmp.eq.s32.totalorder %s16, 0
    %p148 = por %p146, %p147
    %p149 = scmp.le.s32.totalorder 1, %s10
    %p150 = scmp.lt.s32.totalorder %s10, 3
    %p151 = pnand %p149, %p150
    %p152 = pneg %p151
    // Predicated region
    $region9: #{upsampler_block.3} parent=5 // pred_check
      _
    $region10: #{upsampler_block.3} parent=5 // pred_check_branch
      %154 = sbr.rel (%p151) target = $region12
    $region11: #{upsampler_block.3} parent=5 // pred_region
      %s155 = ssub.s32 %s10, 1
      // Predicated region
      $region13: #{upsampler_block.3} parent=11 // pred_check
        %p156 = pneg %p71
      $region14: #{upsampler_block.3} parent=11 // pred_check_branch
        %158 = sbr.rel (%p156) target = $region16
      $region15: #{upsampler_block.3} parent=11 // pred_region
        _
      $region16: #{upsampler_block.3} parent=11 // pred_fallthru
        _
      // Predicated region
      $region17: #{upsampler_block.3} parent=11 // pred_check
        %p159 = pneg %p92
      $region18: #{upsampler_block.3} parent=11 // pred_check_branch
        %161 = sbr.rel (%p159) target = $region20
      $region19: #{upsampler_block.3} parent=11 // pred_region
        _
      $region20: #{upsampler_block.3} parent=11 // pred_fallthru
        _
      // Predicated region
      $region21: #{upsampler_block.3} parent=11 // pred_check
        %p162 = pneg %p113
      $region22: #{upsampler_block.3} parent=11 // pred_check_branch
        %164 = sbr.rel (%p162) target = $region24
      $region23: #{upsampler_block.3} parent=11 // pred_region
        _
      $region24: #{upsampler_block.3} parent=11 // pred_fallthru
        _
    $region12: #{upsampler_block.3} parent=5 // pred_fallthru
      _
    %p165 = scmp.lt.s32.totalorder %s10, 2
    // Predicated region
    $region25: #{upsampler_block.3} parent=5 // pred_check
      %p166 = pneg %p165
    $region26: #{upsampler_block.3} parent=5 // pred_check_branch
      %168 = sbr.rel (%p166) target = $region28
    $region27: #{upsampler_block.3} parent=5 // pred_region
      // Predicated region
      $region29: #{upsampler_block.3} parent=27 // pred_check
        %p169 = pneg %p44
      $region30: #{upsampler_block.3} parent=27 // pred_check_branch
        %171 = sbr.rel (%p169) target = $region32
      $region31: #{upsampler_block.3} parent=27 // pred_region
        %s172 = smul.u32 2, %s18
        %p173 = scmp.lt.s32.totalorder %s17, 1
        %s174 = scalar_select %p173, %s17, 1
        %p175 = scmp.lt.s32.totalorder %s172, 1
        %s176 = scalar_select %p175, %s172, 1
        %s177 = smul.addr %s174, 4
        %s178 = sadd.s32 %s176, %s177
        %s179 = smul.addr %s178, 4
        %s180 = scalar_lea.vmem %s0, %s179
        %s181 = smul.u32 2, %s18
      $region32: #{upsampler_block.3} parent=27 // pred_fallthru
        _
    $region28: #{upsampler_block.3} parent=5 // pred_fallthru
      _
    %p182 = scmp.le.s32.totalorder 1, %s10
    %p183 = scmp.lt.s32.totalorder %s10, 3
    %p184 = pnand %p182, %p183
    %p185 = pneg %p184
    // Predicated region
    $region33: #{upsampler_block.3} parent=5 // pred_check
      _
    $region34: #{upsampler_block.3} parent=5 // pred_check_branch
      %187 = sbr.rel (%p184) target = $region36
    $region35: #{upsampler_block.3} parent=5 // pred_region
      %s188 = ssub.s32 %s10, 1
      %s189 = smul.u32 2, %s20
      %p190 = scmp.lt.s32.totalorder %s19, 1
      %s191 = scalar_select %p190, %s19, 1
      %p192 = scmp.lt.s32.totalorder %s189, 1
      %s193 = scalar_select %p192, %s189, 1
      %s194 = smul.addr %s191, 4
      %s195 = sadd.s32 %s193, %s194
      %s196 = smul.addr %s195, 4
      %s197 = scalar_lea.vmem %s0, %s196
      %p198 = pneg %p50
      %p199 = pneg %p47
      %p200 = pneg %p71
      %p201 = pneg %p68
      %p202 = pneg %p92
      %p203 = pneg %p89
      %p204 = pneg %p113
      %p205 = pneg %p110
      %p206 = pneg %p141
      %p207 = pneg %p138
      %s208 = smul.u32 2, %s20
      %p209 = scmp.lt.s32.totalorder %s19, 1
      %s210 = scalar_select %p209, %s19, 1
      %p211 = scmp.lt.s32.totalorder %s208, 1
      %s212 = scalar_select %p211, %s208, 1
      %s213 = smul.addr %s210, 8
      %s214 = sadd.s32 %s212, %s213
      %s215 = smul.addr %s214, 8
      %s216 = scalar_lea.vmem %s4, %s215
      %s217 = smul.u32 2, %s20
      %p218 = scmp.lt.s32.totalorder %s19, 1
      %s219 = scalar_select %p218, %s19, 1
      %p220 = scmp.lt.s32.totalorder %s217, 1
      %s221 = scalar_select %p220, %s217, 1
      %s222 = smul.addr %s219, 4
      %s223 = sadd.s32 %s221, %s222
      %s224 = smul.addr %s223, 4
      %s225 = scalar_lea.vmem %s0, %s224
      %s226 = smul.u32 2, %s20
      %s227 = smul.u32 2, %s20
      %p228 = scmp.lt.s32.totalorder %s19, 1
      %s229 = scalar_select %p228, %s19, 1
      %p230 = scmp.lt.s32.totalorder %s227, 1
      %s231 = scalar_select %p230, %s227, 1
      %s232 = smul.addr %s229, 8
      %s233 = sadd.s32 %s231, %s232
      %s234 = smul.addr %s233, 8
      %s235 = scalar_lea.vmem %s4, %s234
      %s236 = smul.u32 2, %s20
      %v238 = vld [vmem:[%s1] sm:$0xf]
      %v239 = vld [vmem:[%s1 + $0x4] sm:$0xf]
      %v240 = vld [vmem:[%s1 + $0x8] sm:$0xf]
      %v241 = vld [vmem:[%s1 + $0xc] sm:$0xf]
      %v242 = vld [vmem:[%s225] sm:$0xff]
      %v243 = vld [vmem:[%s225 + $0x8] sm:$0xff]
      %v248 = vunpack.c.l.b16 %v238
      %v249 = vunpack.c.l.b16 %v239
      %v250 = vunpack.c.l.b16 %v240
      %v251 = vunpack.c.l.b16 %v241
      %v252 = vpack.c.b16 %v249, %v248
      %v253 = vpack.c.b16 %v251, %v250
      %v256 = vunpack.c.l.b16 %v242
      %v257 = vunpack.c.h.b16 %v242
      %v258 = vunpack.c.l.b16 %v243
      %v259 = vunpack.c.h.b16 %v243
      %v260 = vpack.c.b16 %v258, %v256
      %v261 = vpack.c.b16 %v259, %v257
      %vm264 = vcmask 130048
      %v266 = vsel %vm264, %v252, 0
      %v269 = vsel %vm264, %v253, 0
      %271 = vmatprep.subr.bf16.mxu0 %v261
      %272 = vmatpush1.bf16.msra.mxu0 %v260
      %273 = vmatprep.subr.bf16.mxu0 0
      %274 = vmatpush1.bf16.msra.mxu0 0
      %275 = vmatprep.subr.bf16.mxu0 0
      %276 = vmatpush1.bf16.msra.mxu0 0
      %277 = vmatprep.subr.bf16.mxu0 0
      %278 = vmatpush1.bf16.msra.mxu0 0
      %279 = vmatprep.subr.bf16.mxu0 0
      %280 = vmatpush1.bf16.msra.mxu0 0
      %281 = vmatprep.subr.bf16.mxu0 0
      %282 = vmatpush1.bf16.msra.mxu0 0
      %283 = vmatprep.subr.bf16.mxu0 0
      %284 = vmatpush1.bf16.msra.mxu0 0
      %285 = vmatprep.subr.bf16.mxu0 0
      %286 = vmatpush1.bf16.msra.mxu0 0
      %287 = vmatprep.subr.bf16.mxu0 0
      %288 = vmatpush1.bf16.msra.mxu0 0
      %289 = vmatprep.subr.bf16.mxu0 0
      %290 = vmatpush1.bf16.msra.mxu0 0
      %291 = vmatprep.subr.bf16.mxu0 0
      %292 = vmatpush1.bf16.msra.mxu0 0
      %293 = vmatprep.subr.bf16.mxu0 0
      %294 = vmatpush1.bf16.msra.mxu0 0
      %295 = vmatprep.subr.bf16.mxu0 0
      %296 = vmatpush1.bf16.msra.mxu0 0
      %297 = vmatprep.subr.bf16.mxu0 0
      %298 = vmatpush1.bf16.msra.mxu0 0
      %299 = vmatprep.subr.bf16.mxu0 0
      %300 = vmatpush1.bf16.msra.mxu0 0
      %301 = vmatprep.subr.bf16.mxu0 0
      %302 = vmatpush1.bf16.msra.mxu0 0
      %303 = vmatprep.mubr.bf16.mxu0 0
      %304 = vmatmul.mubr.bf16.gmra.mrb[0].mxu0 %v266
      %v305 = vpop.f32.mrb[0].mxu0
      %v306 = vadd.f32 0.0, %v305
      %v307 = vpop.f32.mrb[0].mxu0
      %v308 = vadd.f32 0.0, %v307
      %v309 = vpop.f32.mrb[0].mxu0
      %v310 = vadd.f32 0.0, %v309
      %v311 = vpop.f32.mrb[0].mxu0
      %v312 = vadd.f32 0.0, %v311
      %313 = vmatprep.mubr.bf16.mxu0 0
      %314 = vmatmul.mubr.bf16.gmra.mrb[0].mxu0 %v269
      %v315 = vpop.f32.mrb[0].mxu0
      %v316 = vadd.f32 0.0, %v315
      %v317 = vpop.f32.mrb[0].mxu0
      %v318 = vadd.f32 0.0, %v317
      %v319 = vpop.f32.mrb[0].mxu0
      %v320 = vadd.f32 0.0, %v319
      %v321 = vpop.f32.mrb[0].mxu0
      %v322 = vadd.f32 0.0, %v321
      %323 = vdwg.mxu0
      %v324 = vld [vmem:[%s2] sm:$0xff]
      %v325 = vld [vmem:[%s2 + $0x8] sm:$0xff]
      %v326 = vld [vmem:[%s2 + $0x10] sm:$0xff]
      %v327 = vld [vmem:[%s2 + $0x18] sm:$0xff]
      %329 = vset.pattern.permute.xlu0 0
      %330 = vperm.xlu0 %329, %v324
      %v331 = vpop.permute.xlu0 %330
      %334 = vset.pattern.permute.xlu0 0
      %335 = vperm.xlu0 %334, %v325
      %v336 = vpop.permute.xlu0 %335
      %339 = vset.pattern.permute.xlu0 0
      %340 = vperm.xlu0 %339, %v326
      %v341 = vpop.permute.xlu0 %340
      %344 = vset.pattern.permute.xlu0 0
      %345 = vperm.xlu0 %344, %v327
      %v346 = vpop.permute.xlu0 %345
      %v348 = vmul.f32 %v306, %v331
      %v349 = vmul.f32 %v308, %v331
      %v350 = vmul.f32 %v310, %v336
      %v351 = vmul.f32 %v312, %v336
      %v352 = vmul.f32 %v316, %v341
      %v353 = vmul.f32 %v318, %v341
      %v354 = vmul.f32 %v320, %v346
      %v355 = vmul.f32 %v322, %v346
      %v356 = vld [vmem:[%s3] sm:$0xff]
      %v357 = vld [vmem:[%s3 + $0x8] sm:$0xff]
      %v358 = vld [vmem:[%s3 + $0x10] sm:$0xff]
      %v359 = vld [vmem:[%s3 + $0x18] sm:$0xff]
      %361 = vset.pattern.permute.xlu0 0
      %362 = vperm.xlu0 %361, %v356
      %v363 = vpop.permute.xlu0 %362
      %366 = vset.pattern.permute.xlu0 0
      %367 = vperm.xlu0 %366, %v357
      %v368 = vpop.permute.xlu0 %367
      %371 = vset.pattern.permute.xlu0 0
      %372 = vperm.xlu0 %371, %v358
      %v373 = vpop.permute.xlu0 %372
      %376 = vset.pattern.permute.xlu0 0
      %377 = vperm.xlu0 %376, %v359
      %v378 = vpop.permute.xlu0 %377
      %v380 = vadd.f32 %v348, %v363
      %v381 = vadd.f32 %v349, %v363
      %v382 = vadd.f32 %v350, %v368
      %v383 = vadd.f32 %v351, %v368
      %v384 = vadd.f32 %v352, %v373
      %v385 = vadd.f32 %v353, %v373
      %v386 = vadd.f32 %v354, %v378
      %v387 = vadd.f32 %v355, %v378
      %388 = vst [vmem:[%s235] sm:$0xff] %v380
      %389 = vst [vmem:[%s235 + $0x8] sm:$0xff] %v381
      %390 = vst [vmem:[%s235 + $0x10] sm:$0xff] %v382
      %391 = vst [vmem:[%s235 + $0x18] sm:$0xff] %v383
      %392 = vst [vmem:[%s235 + $0x20] sm:$0xff] %v384
      %393 = vst [vmem:[%s235 + $0x28] sm:$0xff] %v385
      %394 = vst [vmem:[%s235 + $0x30] sm:$0xff] %v386
      %395 = vst [vmem:[%s235 + $0x38] sm:$0xff] %v387
      %s396 = smul.u32 2, %s20
      %p397 = scmp.lt.s32.totalorder %s19, 1
      %s398 = scalar_select %p397, %s19, 1
      %p399 = scmp.lt.s32.totalorder %s396, 1
      %s400 = scalar_select %p399, %s396, 1
      %s401 = smul.addr %s398, 8
      %s402 = sadd.s32 %s400, %s401
      %s403 = smul.addr %s402, 8
      %s404 = scalar_lea.vmem %s4, %s403
      // Predicated region
      $region37: #{upsampler_block.3} parent=35 // pred_check
        %p405 = pneg %p138
      $region38: #{upsampler_block.3} parent=35 // pred_check_branch
        %407 = sbr.rel (%p405) target = $region40
      $region39: #{upsampler_block.3} parent=35 // pred_region
        %s408 = smul.u32 2, %s20
      $region40: #{upsampler_block.3} parent=35 // pred_fallthru
        _
    $region36: #{upsampler_block.3} parent=5 // pred_fallthru
      _
    %p409 = scmp.le.s32.totalorder 2, %s10
    // Predicated region
    $region41: #{upsampler_block.3} parent=5 // pred_check
      %p410 = pneg %p409
    $region42: #{upsampler_block.3} parent=5 // pred_check_branch
      %412 = sbr.rel (%p410) target = $region44
    $region43: #{upsampler_block.3} parent=5 // pred_region
      %s413 = ssub.s32 %s10, 2
      // Predicated region
      $region45: #{upsampler_block.3} parent=43 // pred_check
        %p414 = pneg %p144
      $region46: #{upsampler_block.3} parent=43 // pred_check_branch
        %416 = sbr.rel (%p414) target = $region48
      $region47: #{upsampler_block.3} parent=43 // pred_region
        %s417 = smul.u32 2, %s22
        %p418 = scmp.lt.s32.totalorder %s21, 1
        %s419 = scalar_select %p418, %s21, 1
        %p420 = scmp.lt.s32.totalorder %s417, 1
        %s421 = scalar_select %p420, %s417, 1
        %s422 = smul.addr %s419, 8
        %s423 = sadd.s32 %s421, %s422
        %s424 = smul.addr %s423, 8
        %s425 = scalar_lea.vmem %s4, %s424
      $region48: #{upsampler_block.3} parent=43 // pred_fallthru
        _
    $region44: #{upsampler_block.3} parent=5 // pred_fallthru
      _
  $region6: #{upsampler_block.3} parent=0 // loop_footer
    %s14 = sadd.s32 1, %s10
  $region7: #{upsampler_block.3} parent=0 // loop_footer_branch
    %9 = sbr.rel target = $region3
  $region8: #{upsampler_block.3} parent=0 // loop_exit
    _

// kernel: upsampler_block.2
$region0: #{upsampler_block.2}
  #allocation0 [shape = 'u32[]', space=smem, size = 0x4, offset = 0x4, fixed_abs, tag = 'smem constant byte address 0x4 - core index']
  #allocation1 [shape = 'u32[144,128]{1,0:T(1,128)}', space=vmem, size = 0x12000, scoped, tag = 'internal scratch']
  %s0 = inlined_call_operand.vmem [shape: bf16[2,16,256], index: 0, kind: input, shape index: {}]
  %s1 = inlined_call_operand.vmem [shape: bf16[32,16], index: 1, kind: input, shape index: {}]
  %s2 = inlined_call_operand.vmem [shape: f32[32,1], index: 2, kind: input, shape index: {}]
  %s3 = inlined_call_operand.vmem [shape: f32[2,1,32,2], index: 3, kind: output, shape index: {}]
  %s4 = sld [smem:[#allocation0]]
  $region45: #{upsampler_block.2} parent=0
    _
  %s6 = ssub.s32 1, %s4
  %s7 = scalar_select 0, %s6, %s4
  loop: start=0, step=1, limit=4
  $region2: #{upsampler_block.2} parent=0 // loop_pre_header
    _
  $region3: #{upsampler_block.2} parent=0 // loop_header
    %s9 = sphi 0, %s13
    %p10 = scmp.ge.s32.totalorder %s9, 4
    %s16 = sphi 0, %s28
    %s17 = sphi 0, %s24
    %s18 = sphi 0, %s16
    %s19 = sphi 0, %s17
    %s20 = sphi 0, %s18
    %s21 = sphi 0, %s19
    %s33 = sphi 0, %s35
    %s36 = sphi 0, %s33
    %s37 = sphi 0, %s36
    %s53 = sphi 0, %s37
    %s57 = sphi 0, %s57
    %s59 = sphi 0, %s57
    %s60 = sphi 0, %s59
    %s74 = sphi 0, %s60
    %s78 = sphi 0, %s78
    %s80 = sphi 0, %s78
    %s81 = sphi 0, %s80
    %s95 = sphi 0, %s81
    %s103 = sphi 0, %s105
    %s106 = sphi 0, %s103
    %s107 = sphi 0, %s106
    %s123 = sphi 0, %s107
  $region4: #{upsampler_block.2} parent=0 // loop_header_branch
    %12 = sbr.rel (%p10) target = $region8
  $region5: #{upsampler_block.2} parent=0 // loop_body
    %s14 = ssub.s32 %s9, 1
    %s15 = ssub.s32 %s9, 2
    %s22 = sadd.s32 1, %s17
    %p23 = scmp.ge.s32.totalorder %s22, 1
    %s24 = scalar_select %p23, 0, %s22
    %s25 = sadd.s32 1, %s16
    %s26 = scalar_select %p23, %s25, %s16
    %p27 = scmp.ge.s32.totalorder %s26, 2
    %s28 = scalar_select %p27, 0, %s26
    %s29 = ssub.s32 %s16, %s28
    %s30 = ssub.s32 %s17, %s24
    %s31 = sor.u32 %s29, %s30
    %p32 = scmp.eq.s32.totalorder %s31, 0
    %s34 = sadd.s32 %s33, 1
    %s35 = scalar_select %p32, %s33, %s34
    %p38 = pneg %p32
    %p39 = scmp.eq.s32.totalorder %s9, 1
    %p40 = por %p38, %p39
    %p41 = scmp.ne.s32.totalorder %s33, %s36
    %p42 = scmp.eq.s32.totalorder %s9, 0
    %p43 = por %p41, %p42
    %p44 = scmp.ne.s32.totalorder %s33, %s36
    %p45 = scmp.eq.s32.totalorder %s14, 1
    %p46 = por %p44, %p45
    %p47 = scmp.ne.s32.totalorder %s36, %s37
    %p48 = scmp.eq.s32.totalorder %s14, 0
    %p49 = por %p47, %p48
    %p50 = scmp.ne.s32.totalorder %s36, %s37
    %p51 = scmp.eq.s32.totalorder %s15, 1
    %p52 = por %p50, %p51
    %p54 = scmp.ne.s32.totalorder %s37, %s53
    %p55 = scmp.eq.s32.totalorder %s15, 0
    %p56 = por %p54, %p55
    %s58 = sadd.s32 %s57, 1
    %p61 = scmp.eq.s32.totalorder %s9, 1
    %p62 = scmp.ne.s32.totalorder %s57, %s59
    %p63 = scmp.eq.s32.totalorder %s9, 0
    %p64 = por %p62, %p63
    %p65 = scmp.ne.s32.totalorder %s57, %s59
    %p66 = scmp.eq.s32.totalorder %s14, 1
    %p67 = por %p65, %p66
    %p68 = scmp.ne.s32.totalorder %s59, %s60
    %p69 = scmp.eq.s32.totalorder %s14, 0
    %p70 = por %p68, %p69
    %p71 = scmp.ne.s32.totalorder %s59, %s60
    %p72 = scmp.eq.s32.totalorder %s15, 1
    %p73 = por %p71, %p72
    %p75 = scmp.ne.s32.totalorder %s60, %s74
    %p76 = scmp.eq.s32.totalorder %s15, 0
    %p77 = por %p75, %p76
    %s79 = sadd.s32 %s78, 1
    %p82 = scmp.eq.s32.totalorder %s9, 1
    %p83 = scmp.ne.s32.totalorder %s78, %s80
    %p84 = scmp.eq.s32.totalorder %s9, 0
    %p85 = por %p83, %p84
    %p86 = scmp.ne.s32.totalorder %s78, %s80
    %p87 = scmp.eq.s32.totalorder %s14, 1
    %p88 = por %p86, %p87
    %p89 = scmp.ne.s32.totalorder %s80, %s81
    %p90 = scmp.eq.s32.totalorder %s14, 0
    %p91 = por %p89, %p90
    %p92 = scmp.ne.s32.totalorder %s80, %s81
    %p93 = scmp.eq.s32.totalorder %s15, 1
    %p94 = por %p92, %p93
    %p96 = scmp.ne.s32.totalorder %s81, %s95
    %p97 = scmp.eq.s32.totalorder %s15, 0
    %p98 = por %p96, %p97
    %s99 = ssub.s32 %s16, %s28
    %s100 = ssub.s32 %s17, %s24
    %s101 = sor.u32 %s99, %s100
    %p102 = scmp.eq.s32.totalorder %s101, 0
    %s104 = sadd.s32 %s103, 1
    %s105 = scalar_select %p102, %s103, %s104
    %p108 = pneg %p102
    %p109 = scmp.eq.s32.totalorder %s9, 1
    %p110 = por %p108, %p109
    %p111 = scmp.ne.s32.totalorder %s103, %s106
    %p112 = scmp.eq.s32.totalorder %s9, 0
    %p113 = por %p111, %p112
    %p114 = scmp.ne.s32.totalorder %s103, %s106
    %p115 = scmp.eq.s32.totalorder %s14, 1
    %p116 = por %p114, %p115
    %p117 = scmp.ne.s32.totalorder %s106, %s107
    %p118 = scmp.eq.s32.totalorder %s14, 0
    %p119 = por %p117, %p118
    %p120 = scmp.ne.s32.totalorder %s106, %s107
    %p121 = scmp.eq.s32.totalorder %s15, 1
    %p122 = por %p120, %p121
    %p124 = scmp.ne.s32.totalorder %s107, %s123
    %p125 = scmp.eq.s32.totalorder %s15, 0
    %p126 = por %p124, %p125
    %p127 = scmp.le.s32.totalorder 1, %s9
    %p128 = scmp.lt.s32.totalorder %s9, 3
    %p129 = pnand %p127, %p128
    %p130 = pneg %p129
    // Predicated region
    $region9: #{upsampler_block.2} parent=5 // pred_check
      _
    $region10: #{upsampler_block.2} parent=5 // pred_check_branch
      %132 = sbr.rel (%p129) target = $region12
    $region11: #{upsampler_block.2} parent=5 // pred_region
      %s133 = ssub.s32 %s9, 1
      // Predicated region
      $region13: #{upsampler_block.2} parent=11 // pred_check
        %p134 = pneg %p70
      $region14: #{upsampler_block.2} parent=11 // pred_check_branch
        %136 = sbr.rel (%p134) target = $region16
      $region15: #{upsampler_block.2} parent=11 // pred_region
        _
      $region16: #{upsampler_block.2} parent=11 // pred_fallthru
        _
      // Predicated region
      $region17: #{upsampler_block.2} parent=11 // pred_check
        %p137 = pneg %p91
      $region18: #{upsampler_block.2} parent=11 // pred_check_branch
        %139 = sbr.rel (%p137) target = $region20
      $region19: #{upsampler_block.2} parent=11 // pred_region
        _
      $region20: #{upsampler_block.2} parent=11 // pred_fallthru
        _
    $region12: #{upsampler_block.2} parent=5 // pred_fallthru
      _
    %p140 = scmp.lt.s32.totalorder %s9, 2
    // Predicated region
    $region21: #{upsampler_block.2} parent=5 // pred_check
      %p141 = pneg %p140
    $region22: #{upsampler_block.2} parent=5 // pred_check_branch
      %143 = sbr.rel (%p141) target = $region24
    $region23: #{upsampler_block.2} parent=5 // pred_region
      // Predicated region
      $region25: #{upsampler_block.2} parent=23 // pred_check
        %p144 = pneg %p43
      $region26: #{upsampler_block.2} parent=23 // pred_check_branch
        %146 = sbr.rel (%p144) target = $region28
      $region27: #{upsampler_block.2} parent=23 // pred_region
        %s147 = smul.u32 2, %s17
        %p148 = scmp.lt.s32.totalorder %s16, 1
        %s149 = scalar_select %p148, %s16, 1
        %p150 = scmp.lt.s32.totalorder %s147, 1
        %s151 = scalar_select %p150, %s147, 1
        %s152 = smul.addr %s149, 4
        %s153 = sadd.s32 %s151, %s152
        %s154 = smul.addr %s153, 4
        %s155 = scalar_lea.vmem %s0, %s154
        %s156 = smul.u32 2, %s17
      $region28: #{upsampler_block.2} parent=23 // pred_fallthru
        _
    $region24: #{upsampler_block.2} parent=5 // pred_fallthru
      _
    %p157 = scmp.le.s32.totalorder 1, %s9
    %p158 = scmp.lt.s32.totalorder %s9, 3
    %p159 = pnand %p157, %p158
    %p160 = pneg %p159
    // Predicated region
    $region29: #{upsampler_block.2} parent=5 // pred_check
      _
    $region30: #{upsampler_block.2} parent=5 // pred_check_branch
      %162 = sbr.rel (%p159) target = $region32
    $region31: #{upsampler_block.2} parent=5 // pred_region
      %s163 = ssub.s32 %s9, 1
      %s164 = smul.u32 2, %s19
      %p165 = scmp.lt.s32.totalorder %s18, 1
      %s166 = scalar_select %p165, %s18, 1
      %p167 = scmp.lt.s32.totalorder %s164, 1
      %s168 = scalar_select %p167, %s164, 1
      %s169 = smul.addr %s166, 4
      %s170 = sadd.s32 %s168, %s169
      %s171 = smul.addr %s170, 4
      %s172 = scalar_lea.vmem %s0, %s171
      %p173 = pneg %p49
      %p174 = pneg %p46
      %p175 = pneg %p70
      %p176 = pneg %p67
      %p177 = pneg %p91
      %p178 = pneg %p88
      %p179 = pneg %p119
      %p180 = pneg %p116
      %p181 = scmp.lt.s32.totalorder %s18, 1
      %s182 = scalar_select %p181, %s18, 1
      %p183 = scmp.lt.s32.totalorder %s19, 0
      %s184 = scalar_select %p183, %s19, 0
      %s185 = smul.addr %s184, 4
      %s186 = smul.addr %s182, 4
      %s187 = sadd.s32 %s185, %s186
      %s188 = smul.addr %s187, 8
      %s189 = scalar_lea.vmem %s3, %s188
      %s190 = smul.u32 2, %s19
      %p191 = scmp.lt.s32.totalorder %s18, 1
      %s192 = scalar_select %p191, %s18, 1
      %p193 = scmp.lt.s32.totalorder %s190, 1
      %s194 = scalar_select %p193, %s190, 1
      %s195 = smul.addr %s192, 4
      %s196 = sadd.s32 %s194, %s195
      %s197 = smul.addr %s196, 4
      %s198 = scalar_lea.vmem %s0, %s197
      %s199 = smul.u32 2, %s19
      %p200 = scmp.lt.s32.totalorder %s18, 1
      %s201 = scalar_select %p200, %s18, 1
      %p202 = scmp.lt.s32.totalorder %s19, 0
      %s203 = scalar_select %p202, %s19, 0
      %s204 = smul.addr %s203, 4
      %s205 = smul.addr %s201, 4
      %s206 = sadd.s32 %s204, %s205
      %s207 = smul.addr %s206, 8
      %s208 = scalar_lea.vmem %s3, %s207
      %v210 = vld [vmem:[%s1] sm:$0xf]
      %v211 = vld [vmem:[%s1 + $0x4] sm:$0xf]
      %v212 = vld [vmem:[%s1 + $0x8] sm:$0xf]
      %v213 = vld [vmem:[%s1 + $0xc] sm:$0xf]
      %v214 = vld [vmem:[%s198] sm:$0xff]
      %v215 = vld [vmem:[%s198 + $0x8] sm:$0xff]
      %v216 = vld [vmem:[%s2] sm:$0xff]
      %v217 = vld [vmem:[%s2 + $0x8] sm:$0xff]
      %v218 = vld [vmem:[%s2 + $0x10] sm:$0xff]
      %v219 = vld [vmem:[%s2 + $0x18] sm:$0xff]
      %221 = vset.pattern.permute.xlu0 0
      %222 = vperm.xlu0 %221, %v216
      %v223 = vpop.permute.xlu0 %222
      %226 = vset.pattern.permute.xlu0 0
      %227 = vperm.xlu0 %226, %v217
      %v228 = vpop.permute.xlu0 %227
      %231 = vset.pattern.permute.xlu0 0
      %232 = vperm.xlu0 %231, %v218
      %v233 = vpop.permute.xlu0 %232
      %236 = vset.pattern.permute.xlu0 0
      %237 = vperm.xlu0 %236, %v219
      %v238 = vpop.permute.xlu0 %237
      %v244 = vunpack.c.l.b16 %v210
      %v245 = vunpack.c.l.b16 %v211
      %v246 = vunpack.c.l.b16 %v212
      %v247 = vunpack.c.l.b16 %v213
      %v248 = vpack.c.b16 %v245, %v244
      %v249 = vpack.c.b16 %v247, %v246
      %v252 = vunpack.c.l.b16 %v214
      %v253 = vunpack.c.h.b16 %v214
      %v254 = vunpack.c.l.b16 %v215
      %v255 = vunpack.c.h.b16 %v215
      %v256 = vpack.c.b16 %v254, %v252
      %v257 = vpack.c.b16 %v255, %v253
      %vm260 = vcmask 130048
      %v262 = vsel %vm260, %v248, 0
      %v265 = vsel %vm260, %v249, 0
      %267 = vmatprep.subr.bf16.mxu0 %v257
      %268 = vmatpush1.bf16.msra.mxu0 %v256
      %269 = vmatprep.subr.bf16.mxu0 0
      %270 = vmatpush1.bf16.msra.mxu0 0
      %271 = vmatprep.subr.bf16.mxu0 0
      %272 = vmatpush1.bf16.msra.mxu0 0
      %273 = vmatprep.subr.bf16.mxu0 0
      %274 = vmatpush1.bf16.msra.mxu0 0
      %275 = vmatprep.subr.bf16.mxu0 0
      %276 = vmatpush1.bf16.msra.mxu0 0
      %277 = vmatprep.subr.bf16.mxu0 0
      %278 = vmatpush1.bf16.msra.mxu0 0
      %279 = vmatprep.subr.bf16.mxu0 0
      %280 = vmatpush1.bf16.msra.mxu0 0
      %281 = vmatprep.subr.bf16.mxu0 0
      %282 = vmatpush1.bf16.msra.mxu0 0
      %283 = vmatprep.subr.bf16.mxu0 0
      %284 = vmatpush1.bf16.msra.mxu0 0
      %285 = vmatprep.subr.bf16.mxu0 0
      %286 = vmatpush1.bf16.msra.mxu0 0
      %287 = vmatprep.subr.bf16.mxu0 0
      %288 = vmatpush1.bf16.msra.mxu0 0
      %289 = vmatprep.subr.bf16.mxu0 0
      %290 = vmatpush1.bf16.msra.mxu0 0
      %291 = vmatprep.subr.bf16.mxu0 0
      %292 = vmatpush1.bf16.msra.mxu0 0
      %293 = vmatprep.subr.bf16.mxu0 0
      %294 = vmatpush1.bf16.msra.mxu0 0
      %295 = vmatprep.subr.bf16.mxu0 0
      %296 = vmatpush1.bf16.msra.mxu0 0
      %297 = vmatprep.subr.bf16.mxu0 0
      %298 = vmatpush1.bf16.msra.mxu0 0
      %299 = vmatprep.mubr.bf16.mxu0 0
      %300 = vmatmul.mubr.bf16.gmra.mrb[0].mxu0 %v262
      %v301 = vpop.f32.mrb[0].mxu0
      %v302 = vadd.f32 %v223, %v301
      %v303 = vpop.f32.mrb[0].mxu0
      %v304 = vadd.f32 %v223, %v303
      %v305 = vpop.f32.mrb[0].mxu0
      %v306 = vadd.f32 %v228, %v305
      %v307 = vpop.f32.mrb[0].mxu0
      %v308 = vadd.f32 %v228, %v307
      %309 = vmatprep.mubr.bf16.mxu0 0
      %310 = vmatmul.mubr.bf16.gmra.mrb[0].mxu0 %v265
      %v311 = vpop.f32.mrb[0].mxu0
      %v312 = vadd.f32 %v233, %v311
      %v313 = vpop.f32.mrb[0].mxu0
      %v314 = vadd.f32 %v233, %v313
      %v315 = vpop.f32.mrb[0].mxu0
      %v316 = vadd.f32 %v238, %v315
      %v317 = vpop.f32.mrb[0].mxu0
      %v318 = vadd.f32 %v238, %v317
      %319 = vdwg.mxu0
      %v320 = vadd.f32 %v302, %v304
      %321 = vadd.xlane.f32.xlu0 %v320
      %v322 = vpop.xlane.xlu0 %321
      %v323 = vadd.f32 %v306, %v308
      %324 = vadd.xlane.f32.xlu0 %v323
      %v325 = vpop.xlane.xlu0 %324
      %v326 = vadd.f32 %v312, %v314
      %327 = vadd.xlane.f32.xlu0 %v326
      %v328 = vpop.xlane.xlu0 %327
      %v329 = vadd.f32 %v316, %v318
      %330 = vadd.xlane.f32.xlu0 %v329
      %v331 = vpop.xlane.xlu0 %330
      %v332 = vmul.f32 %v302, %v302
      %v333 = vmul.f32 %v304, %v304
      %v334 = vmul.f32 %v306, %v306
      %v335 = vmul.f32 %v308, %v308
      %v336 = vmul.f32 %v312, %v312
      %v337 = vmul.f32 %v314, %v314
      %v338 = vmul.f32 %v316, %v316
      %v339 = vmul.f32 %v318, %v318
      %v340 = vadd.f32 %v332, %v333
      %341 = vadd.xlane.f32.xlu0 %v340
      %v342 = vpop.xlane.xlu0 %341
      %v343 = vadd.f32 %v334, %v335
      %344 = vadd.xlane.f32.xlu0 %v343
      %v345 = vpop.xlane.xlu0 %344
      %v346 = vadd.f32 %v336, %v337
      %347 = vadd.xlane.f32.xlu0 %v346
      %v348 = vpop.xlane.xlu0 %347
      %v349 = vadd.f32 %v338, %v339
      %350 = vadd.xlane.f32.xlu0 %v349
      %v351 = vpop.xlane.xlu0 %350
      %vm352 = vcmask 7168
      %v353 = vsel %vm352, %v322, %v342
      %v354 = vsel %vm352, %v325, %v345
      %v355 = vsel %vm352, %v328, %v348
      %v356 = vsel %vm352, %v331, %v351
      %vm357 = vcmask 15360
      %358 = vst.msk [vmem:[%s208] sm:$0xff] %vm357, %v353
      %359 = vst.msk [vmem:[%s208 + $0x8] sm:$0xff] %vm357, %v354
      %360 = vst.msk [vmem:[%s208 + $0x10] sm:$0xff] %vm357, %v355
      %361 = vst.msk [vmem:[%s208 + $0x18] sm:$0xff] %vm357, %v356
      %p362 = scmp.lt.s32.totalorder %s18, 1
      %s363 = scalar_select %p362, %s18, 1
      %p364 = scmp.lt.s32.totalorder %s19, 0
      %s365 = scalar_select %p364, %s19, 0
      %s366 = smul.addr %s365, 4
      %s367 = smul.addr %s363, 4
      %s368 = sadd.s32 %s366, %s367
      %s369 = smul.addr %s368, 8
      %s370 = scalar_lea.vmem %s3, %s369
      // Predicated region
      $region33: #{upsampler_block.2} parent=31 // pred_check
        %p371 = pneg %p116
      $region34: #{upsampler_block.2} parent=31 // pred_check_branch
        %373 = sbr.rel (%p371) target = $region36
      $region35: #{upsampler_block.2} parent=31 // pred_region
        _
      $region36: #{upsampler_block.2} parent=31 // pred_fallthru
        _
    $region32: #{upsampler_block.2} parent=5 // pred_fallthru
      _
    %p374 = scmp.le.s32.totalorder 2, %s9
    // Predicated region
    $region37: #{upsampler_block.2} parent=5 // pred_check
      %p375 = pneg %p374
    $region38: #{upsampler_block.2} parent=5 // pred_check_branch
      %377 = sbr.rel (%p375) target = $region40
    $region39: #{upsampler_block.2} parent=5 // pred_region
      %s378 = ssub.s32 %s9, 2
      // Predicated region
      $region41: #{upsampler_block.2} parent=39 // pred_check
        %p379 = pneg %p122
      $region42: #{upsampler_block.2} parent=39 // pred_check_branch
        %381 = sbr.rel (%p379) target = $region44
      $region43: #{upsampler_block.2} parent=39 // pred_region
        %p382 = scmp.lt.s32.totalorder %s20, 1
        %s383 = scalar_select %p382, %s20, 1
        %p384 = scmp.lt.s32.totalorder %s21, 0
        %s385 = scalar_select %p384, %s21, 0
        %s386 = smul.addr %s385, 4
        %s387 = smul.addr %s383, 4
        %s388 = sadd.s32 %s386, %s387
        %s389 = smul.addr %s388, 8
        %s390 = scalar_lea.vmem %s3, %s389
      $region44: #{upsampler_block.2} parent=39 // pred_fallthru
        _
    $region40: #{upsampler_block.2} parent=5 // pred_fallthru
      _
  $region6: #{upsampler_block.2} parent=0 // loop_footer
    %s13 = sadd.s32 1, %s9
  $region7: #{upsampler_block.2} parent=0 // loop_footer_branch
    %8 = sbr.rel target = $region3
  $region8: #{upsampler_block.2} parent=0 // loop_exit
    _

</llo_original>
